<compile_context>
chip_gen: v5e
topology: v5e:2x2
jax: 0.10.0
libtpu: 0.0.40
codegen_flags: <defaults>
</compile_context>

<pallas_src>
import jax
import jax.numpy as jnp
import numpy as np
from jax.experimental import pallas as pl
from jax.experimental.pallas import tpu as pltpu


# ----------------------------- parameter setup (glue, plain JAX) -----------------------------

def _hermite(n, t):
    # physicists' Hermite polynomial H_n(t)
    if n == 0:
        return jnp.ones_like(t)
    if n == 1:
        return 2.0 * t
    hm2, hm1 = jnp.ones_like(t), 2.0 * t
    for k in range(2, n + 1):
        hm2, hm1 = hm1, 2.0 * t * hm1 - 2.0 * (k - 1) * hm2
    return hm1


def gaussian_basis_2d(x, y, sigma, max_ord):
    # TODO(synk): GaussianBasis2d was not provided with the module; we use the standard
    # 2-D Gaussian-derivative (Hermite-Gaussian) basis of (max_ord+1)**2 filters.
    g = jnp.exp(-(x ** 2 + y ** 2) / (2.0 * sigma ** 2))
    tx = x / (sigma * jnp.sqrt(2.0))
    ty = y / (sigma * jnp.sqrt(2.0))
    basis = []
    for i in range(max_ord + 1):
        for j in range(max_ord + 1):
            basis.append(_hermite(i, tx) * _hermite(j, ty) * g)
    return jnp.stack(basis, axis=0)  # (F, N, N)


def compute_filter_weights(l2, sigma, max_ord):
    # Faithful port of GConvV2.compute_filter_weights(l2, l2).
    support = l2[None, :, :] - l2[:, None, :]                       # (N, N, 2)
    x = support[..., 0]
    y = support[..., 1]
    r = jnp.sqrt(x ** 2 + y ** 2)
    local_support = jnp.sort(r, axis=1)[:, 1:6]                     # 5 nearest neighbours
    local_support = jnp.mean(local_support, axis=-1)[None, :]       # (1, N)
    local_support = jnp.clip(local_support, 1e-6, None)
    x = x / local_support
    y = y / local_support
    w = gaussian_basis_2d(x, y, sigma, max_ord)                     # (F, N, N) indexed [f, n, m]
    w_hi = w[1:] - jnp.mean(w[1:], axis=-2, keepdims=True)
    norm = jnp.clip(jnp.sqrt(jnp.sum(w_hi ** 2, axis=-2, keepdims=True)), 1e-6, None)
    w_hi = w_hi / norm
    s0 = jnp.clip(jnp.sum(w[0], axis=-2, keepdims=True), 1e-6, None)
    w0 = w[0] / s0
    return jnp.concatenate([w0[None], w_hi], axis=0)                # (F, N, N)


# ----------------------------------- Pallas kernel (hot path) -----------------------------------

def _convv2_matmul_kernel(x_ref, k_ref, b_ref, o_ref, acc_ref):
    # x_ref: (BB, TK)    activation block, rows = batch, cols = flattened (c, m)
    # k_ref: (TK, CB)    fused weight block, cols = flattened (o, n), zero-padded to 128*
    # b_ref: (1,  CB)    bias row (f32, zero-padded)
    # o_ref: (BB, CB)    output block
    # acc_ref: (BB, CB)  f32 accumulator scratch (resident across the k grid axis)
    @pl.when(pl.program_id(2) == 0)
    def _init():
        acc_ref[...] = jnp.zeros_like(acc_ref)

    acc_ref[...] += jnp.dot(x_ref[...], k_ref[...],
                            preferred_element_type=jnp.float32)

    @pl.when(pl.program_id(2) == pl.num_programs(2) - 1)
    def _store():
        o_ref[...] = (acc_ref[...] + b_ref[...]).astype(o_ref.dtype)


def _round_up(v, m):
    return ((v + m - 1) // m) * m


def make_conv_v2_forward(basis_weights, conv_w, conv_b, *,
                         compute_dtype=jnp.float32, out_dtype=None,
                         block_b=None, block_cols=None, block_k=None,
                         xla_fallback_for_tiny=False):
    """Build a jitted ConvV2 forward: x (B, C, M) -> y (B, O, N).

    Folds the basis contraction into the 1x1-conv weight ONCE and returns a closure so
    per-call work is just the Pallas matmul (+ fused pad/reshape plumbing under jit).
    """
    F, N, M = basis_weights.shape
    O, CF = conv_w.shape
    assert CF % F == 0, "conv_w in-features must be C * (max_ord+1)^2"
    C = CF // F
    cm, cols = C * M, O * N

    compute_dt = jnp.dtype(compute_dtype)

    # ---- per-generation VMEM budget & tile defaults -------------------------------------
    try:
        vmem_cap = int(pltpu.get_tpu_info().vmem_capacity_bytes)
    except Exception:
        vmem_cap = 64 * 1024 * 1024            # conservative (v7x-sized) fallback
    budget = int(vmem_cap * 0.75)              # leave headroom for compiler scratch

    big_vmem = vmem_cap >= 96 * 1024 * 1024    # v5e / v6e (128 MiB physical)
    if block_b is None:
        block_b = 512 if big_vmem else 256
    if block_cols is None:
        block_cols = 1024 if big_vmem else 512
    if block_k is None:
        block_k = 1024 if big_vmem else 512

    bb_align = 16 if compute_dt == jnp.bfloat16 else 8   # full bf16 vregs in the sublane dim
    block_b = max(bb_align, (block_b // bb_align) * bb_align)
    block_cols = max(128, (block_cols // 128) * 128)
    block_k = max(128, (block_k // 128) * 128)

    cols128 = _round_up(cols, 128)             # lane-dense output -> unmasked vst
    col_block = min(block_cols, cols128)
    tk = cm if cm <= block_k else block_k      # full contraction in one block when it fits

    in_sz = compute_dt.itemsize
    out_sz = 4                                 # conservative (f32 output) for VMEM sizing

    def blk_bytes(bb_, tk_, cb_):
        # double-buffered inputs + output, f32 accumulator scratch, bias row
        return (2 * (bb_ * tk_ + tk_ * cb_ + cb_) * in_sz
                + 2 * bb_ * cb_ * out_sz
                + bb_ * cb_ * 4)

    while blk_bytes(block_b, tk, col_block) > budget:
        if col_block > 128:
            col_block = max(128, (col_block // 2 // 128) * 128)
        elif block_b > bb_align:
            block_b = max(bb_align, (block_b // 2 // bb_align) * bb_align)
        elif tk > 128:
            tk = max(128, (tk // 2 // 128) * 128)
        else:
            break

    # v7x has 2 TensorCores: keep both busy by providing >=2 "parallel" column blocks
    # whenever the per-row work is non-trivial (harmless on 1-TC v5e/v6e).
    if cols128 // col_block == 1 and col_block >= 256 and cm * cols >= (1 << 18):
        col_block = max(128, (col_block // 2 // 128) * 128)

    cols_pad = _round_up(cols128, col_block)
    cm_pad = cm if tk >= cm else _round_up(cm, tk)
    tk = min(tk, cm_pad)
    n_col = cols_pad // col_block
    n_k = cm_pad // tk

    est_vmem = blk_bytes(block_b, tk, col_block)
    vmem_limit = None
    if est_vmem > 16 * 1024 * 1024:            # v5e scoped default (smallest of the three)
        vmem_limit = min(est_vmem + (8 << 20), int(vmem_cap * 0.8))   # never above physical

    # ---- one-time fold of both parameter contractions (hoisted out of the hot path) -----
    conv_w3 = conv_w.reshape(O, C, F).astype(jnp.float32)            # conv_w3[o,c,f] = conv_w[o, c*F+f]
    k_fused = jnp.einsum("ocf,fnm->cmon", conv_w3,
                         basis_weights.astype(jnp.float32)).reshape(cm, cols)
    bias_row = jnp.repeat(conv_b.astype(jnp.float32), N).reshape(1, cols)

    k_pad = jnp.pad(k_fused.astype(compute_dt),
                    ((0, cm_pad - cm), (0, cols_pad - cols)))
    bias_pad = jnp.pad(bias_row, ((0, 0), (0, cols_pad - cols)))

    @jax.jit
    def forward(x):
        B = x.shape[0]
        odt = jnp.dtype(out_dtype) if out_dtype is not None else x.dtype
        x2d = x.reshape(B, cm).astype(compute_dt)

        if (xla_fallback_for_tiny and n_col * n_k == 1 and B <= block_b
                and B * cm * cols < (1 << 22)):
            # Degenerate single-tile problem: plain XLA beats kernel launch/DMA overhead.
            y = jnp.dot(x2d, k_pad[:cm, :cols], preferred_element_type=jnp.float32)
            return (y + bias_row).astype(odt).reshape(B, O, N)

        bb = min(block_b, _round_up(B, bb_align))
        bpad = _round_up(B, bb)
        if bpad > B or cm_pad > cm:
            x2d = jnp.pad(x2d, ((0, bpad - B), (0, cm_pad - cm)))
        n_b = bpad // bb

        cost = pl.CostEstimate(
            flops=2 * bpad * cm_pad * cols_pad,
            transcendentals=0,
            bytes_accessed=int(
                x2d.size * in_sz * n_col          # x re-streamed once per column block
                + k_pad.size * in_sz * n_b        # K re-streamed once per batch block
                + bias_pad.size * 4
                + bpad * cols_pad * jnp.dtype(odt).itemsize),
        )

        out = pl.pallas_call(
            _convv2_matmul_kernel,
            out_shape=jax.ShapeDtypeStruct((bpad, cols_pad), odt),
            grid_spec=pltpu.PrefetchScalarGridSpec(
                num_scalar_prefetch=0,
                # (cols, batch, k): batch is the inner parallel axis, so when n_k == 1 the
                # large K tile's block index is constant across the batch sweep (resident),
                # and only the small x tile re-streams. k (reduction) is innermost.
                grid=(n_col, n_b, n_k),
                in_specs=[
                    pl.BlockSpec((bb, tk), lambda j, i, k: (i, k)),
                    pl.BlockSpec((tk, col_block), lambda j, i, k: (k, j)),
                    pl.BlockSpec((1, col_block), lambda j, i, k: (0, j)),
                ],
                out_specs=pl.BlockSpec((bb, col_block), lambda j, i, k: (i, j)),
                scratch_shapes=[pltpu.VMEM((bb, col_block), jnp.float32)],
            ),
            compiler_params=pltpu.CompilerParams(
                dimension_semantics=("parallel", "parallel", "arbitrary"),
                vmem_limit_bytes=vmem_limit,
            ),
            cost_estimate=cost,
        )(x2d, k_pad, bias_pad)

        # layout plumbing back to Conv1d's (B, O, N) NCW layout (fused under jit)
        return out[:B, :cols].reshape(B, O, N)

    return forward


# --------------------------------------------- main ---------------------------------------------

def _reference(x, basis_weights, conv_w, conv_b):
    B, C, _ = x.shape
    F = basis_weights.shape[0]
    N = basis_weights.shape[1]
    t = jnp.einsum("bcm,fnm->bcfn", x, basis_weights).reshape(B, C * F, N)
    return jnp.einsum("ok,bkn->bon", conv_w, t) + conv_b[None, :, None]


if __name__ == "__main__":
    B, C, O, max_ord, sigma = 2, 4, 8, 1, 1.0
    F = (max_ord + 1) ** 2

    # l2: 4x4 grid of 2-D sample point coordinates -> N = M = 16 points.
    side = 4
    coords = jnp.stack(
        jnp.meshgrid(jnp.arange(side, dtype=jnp.float32),
                     jnp.arange(side, dtype=jnp.float32), indexing="ij"),
        axis=-1,
    ).reshape(-1, 2)
    N = coords.shape[0]

    basis_weights = compute_filter_weights(coords, sigma, max_ord)   # (F, N, N), non-trainable buffer

    key = jax.random.PRNGKey(0)
    kx, kw, kb, kx2, kw2, kb2 = jax.random.split(key, 6)
    x = jax.random.normal(kx, (B, C, N), dtype=jnp.float32)
    # nn.Conv1d(C*F, O, 1): weight trunc_normal(std=0.02) ~ normal*0.02 here,
    # bias uniform(-1/sqrt(fan_in), 1/sqrt(fan_in)).
    conv_w = 0.02 * jax.random.normal(kw, (O, C * F), dtype=jnp.float32)
    bound = 1.0 / np.sqrt(C * F)
    conv_b = jax.random.uniform(kb, (O,), minval=-bound, maxval=bound, dtype=jnp.float32)

    ref = _reference(x, basis_weights, conv_w, conv_b)

    # 1) f32 Pallas path (strict correctness check, single grid cell)
    fwd = make_conv_v2_forward(basis_weights, conv_w, conv_b)
    out = jax.block_until_ready(fwd(x))
    assert out.shape == (B, O, N)
    np.testing.assert_allclose(np.asarray(out), np.asarray(ref), atol=1e-4, rtol=1e-4)

    # 2) bf16 MXU path (f32 accumulation via preferred_element_type), looser tolerance
    fwd_bf16 = make_conv_v2_forward(basis_weights, conv_w, conv_b,
                                    compute_dtype=jnp.bfloat16)
    out_bf16 = jax.block_until_ready(fwd_bf16(x))
    np.testing.assert_allclose(np.asarray(out_bf16), np.asarray(ref), atol=5e-2, rtol=5e-2)

    # 3) exercise the multi-block path: batch blocking + row padding + k-tiled accumulator
    C2, B2 = 16, 50
    x2 = jax.random.normal(kx2, (B2, C2, N), dtype=jnp.float32)
    conv_w2 = 0.02 * jax.random.normal(kw2, (O, C2 * F), dtype=jnp.float32)
    bound2 = 1.0 / np.sqrt(C2 * F)
    conv_b2 = jax.random.uniform(kb2, (O,), minval=-bound2, maxval=bound2, dtype=jnp.float32)
    fwd2 = make_conv_v2_forward(basis_weights, conv_w2, conv_b2,
                                block_b=32, block_cols=128, block_k=128)
    out2 = jax.block_until_ready(fwd2(x2))       # grid = (1, 2, 2): batch blocks + k accumulation
    ref2 = _reference(x2, basis_weights, conv_w2, conv_b2)
    np.testing.assert_allclose(np.asarray(out2), np.asarray(ref2), atol=1e-4, rtol=1e-4)

    # 4) plain-XLA fallback for degenerate single-tile shapes (optional fast path)
    fwd_tiny = make_conv_v2_forward(basis_weights, conv_w, conv_b,
                                    xla_fallback_for_tiny=True)
    out_tiny = jax.block_until_ready(fwd_tiny(x))
    np.testing.assert_allclose(np.asarray(out_tiny), np.asarray(ref), atol=1e-4, rtol=1e-4)

    print("KERNEL_OK")
</pallas_src>

<mosaic_0001>
module attributes {stable_mosaic.version = 11 : i64} {
  func.func @_convv2_matmul_kernel(%arg0: i32, %arg1: i32, %arg2: i32, %arg3: memref<8x64xf32, #tpu.memory_space<vmem>>, %arg4: memref<64x128xf32, #tpu.memory_space<vmem>>, %arg5: memref<1x128xf32, #tpu.memory_space<vmem>>, %arg6: memref<8x128xf32, #tpu.memory_space<vmem>>, %arg7: memref<8x128xf32, #tpu.memory_space<vmem>>) attributes {dimension_semantics = [#tpu.dimension_semantics<parallel>, #tpu.dimension_semantics<parallel>, #tpu.dimension_semantics<arbitrary>], iteration_bounds = array<i64: 1, 1, 1>, scalar_prefetch = 0 : i64, scratch_operands = 1 : i64, tpu.core_type = #tpu.core_type<tc>, window_params = [{transform_indices = @transform_0, window_bounds = array<i64: 8, 64>}, {transform_indices = @transform_1, window_bounds = array<i64: 64, 128>}, {transform_indices = @transform_2, window_bounds = array<i64: 1, 128>}, {transform_indices = @transform_3, window_bounds = array<i64: 8, 128>}]} {
    %c0_i32 = arith.constant 0 : i32
    %0 = arith.cmpi eq, %arg2, %c0_i32 : i32
    %1 = arith.extui %0 : i1 to i32
    %c0_i32_0 = arith.constant 0 : i32
    %2 = arith.cmpi ne, %1, %c0_i32_0 : i32
    scf.if %2 {
      %cst_10 = arith.constant 0.000000e+00 : f32
      %12 = vector.broadcast %cst_10 : f32 to vector<8x128xf32>
      %c0_11 = arith.constant 0 : index
      %c0_12 = arith.constant 0 : index
      %13 = vector.load %arg7[%c0_11, %c0_12] : memref<8x128xf32, #tpu.memory_space<vmem>>, vector<8x128xf32>
      tpu.vector_store %arg7[%c0_11, %c0_12], %12 {strides = array<i32>} : memref<8x128xf32, #tpu.memory_space<vmem>>, vector<8x128xf32>,
    } else {
    }
    %c0 = arith.constant 0 : index
    %c0_1 = arith.constant 0 : index
    %3 = vector.load %arg7[%c0, %c0_1] : memref<8x128xf32, #tpu.memory_space<vmem>>, vector<8x128xf32>
    %c0_2 = arith.constant 0 : index
    %c0_3 = arith.constant 0 : index
    %4 = vector.load %arg3[%c0_2, %c0_3] : memref<8x64xf32, #tpu.memory_space<vmem>>, vector<8x64xf32>
    %c0_4 = arith.constant 0 : index
    %c0_5 = arith.constant 0 : index
    %5 = vector.load %arg4[%c0_4, %c0_5] : memref<64x128xf32, #tpu.memory_space<vmem>>, vector<64x128xf32>
    %cst = arith.constant dense<0.000000e+00> : vector<8x128xf32>
    %6 = tpu.matmul %4, %5, %cst {dimension_numbers = #tpu.dot_dimension_numbers<[1], [0], [0], [1], [0, 0, 1, 1], [], []>} : vector<8x64xf32>, vector<64x128xf32>, vector<8x128xf32> -> vector<8x128xf32>
    %7 = arith.addf %3, %6 : vector<8x128xf32>
    %c0_6 = arith.constant 0 : index
    %c0_7 = arith.constant 0 : index
    %8 = vector.load %arg7[%c0_6, %c0_7] : memref<8x128xf32, #tpu.memory_space<vmem>>, vector<8x128xf32>
    tpu.vector_store %arg7[%c0_6, %c0_7], %7 {strides = array<i32>} : memref<8x128xf32, #tpu.memory_space<vmem>>, vector<8x128xf32>,
    %c0_i32_8 = arith.constant 0 : i32
    %9 = arith.cmpi eq, %arg2, %c0_i32_8 : i32
    %10 = arith.extui %9 : i1 to i32
    %c0_i32_9 = arith.constant 0 : i32
    %11 = arith.cmpi ne, %10, %c0_i32_9 : i32
    scf.if %11 {
      %c0_10 = arith.constant 0 : index
      %c0_11 = arith.constant 0 : index
      %12 = vector.load %arg7[%c0_10, %c0_11] : memref<8x128xf32, #tpu.memory_space<vmem>>, vector<8x128xf32>
      %c0_12 = arith.constant 0 : index
      %c0_13 = arith.constant 0 : index
      %13 = vector.load %arg5[%c0_12, %c0_13] : memref<1x128xf32, #tpu.memory_space<vmem>>, vector<1x128xf32>
      %14 = vector.broadcast %13 : vector<1x128xf32> to vector<8x128xf32>
      %15 = arith.addf %12, %14 : vector<8x128xf32>
      %c0_14 = arith.constant 0 : index
      %c0_15 = arith.constant 0 : index
      %16 = vector.load %arg6[%c0_14, %c0_15] : memref<8x128xf32, #tpu.memory_space<vmem>>, vector<8x128xf32>
      tpu.vector_store %arg6[%c0_14, %c0_15], %15 {strides = array<i32>} : memref<8x128xf32, #tpu.memory_space<vmem>>, vector<8x128xf32>,
    } else {
    }
    return
  }
  func.func @transform_0(%arg0: i32, %arg1: i32, %arg2: i32) -> (i32, i32) {
    %c0_i32 = arith.constant 0 : i32
    return %arg1, %arg2 : i32, i32
  }
  func.func @transform_1(%arg0: i32, %arg1: i32, %arg2: i32) -> (i32, i32) {
    %c0_i32 = arith.constant 0 : i32
    return %arg2, %arg0 : i32, i32
  }
  func.func @transform_2(%arg0: i32, %arg1: i32, %arg2: i32) -> (i32, i32) {
    %c0_i32 = arith.constant 0 : i32
    %c0_i32_0 = arith.constant 0 : i32
    return %c0_i32, %arg0 : i32, i32
  }
  func.func @transform_3(%arg0: i32, %arg1: i32, %arg2: i32) -> (i32, i32) {
    %c0_i32 = arith.constant 0 : i32
    return %arg1, %arg0 : i32, i32
  }
}

</mosaic_0001>

<llo_original>
// kernel: forward.1
$region0: #{forward.1}
  #allocation0 [shape = 'u32[]', space=smem, size = 0x4, offset = 0x4, fixed_abs, tag = 'smem constant byte address 0x4 - core index']
  #allocation1 [shape = 'u32[72,128]{1,0:T(1,128)}', space=vmem, size = 0x9000, scoped, tag = 'internal scratch']
  #allocation2 [shape = 'f32[8,128]{1,0:T(8,128)}', space=vmem, size = 0x1000, scoped, tag = 'scratch operand']
  %s0 = inlined_call_operand.vmem [shape: f32[8,64], index: 0, kind: input, shape index: {}]
  %s1 = inlined_call_operand.hbm [shape: f32[64,128], index: 1, kind: input, shape index: {}]
  %s2 = inlined_call_operand.vmem [shape: f32[1,128], index: 2, kind: input, shape index: {}]
  %s3 = inlined_call_operand.vmem [shape: f32[8,128], index: 3, kind: output, shape index: {}]
  %s4 = sld [smem:[#allocation0]]
  $region34: #{forward.1} parent=0
    _
  %s6 = ssub.s32 1, %s4
  %s7 = scalar_select 0, %s6, %s4
  $region1: #{forward.1} parent=0
    #allocation3 [shape = 'u8[32768]{0}', space=vmem, size = 0x8000, scoped, tag = 'input window, operand 1, single buffered']
    #allocation4 [shape = 's32[1]{0}', space=sflag, size = 0x4, scoped, tag = 'scoped memory for forward.1']
    %8 = vsyncpa [#allocation4], 0
    // Predicated region
    $region2: #{forward.1} parent=1 // pred_check
      _
    $region3: #{forward.1} parent=1 // pred_check_branch
      %10 = sbr.rel (0) target = $region5
    $region4: #{forward.1} parent=1 // pred_region
      _
    $region5: #{forward.1} parent=1 // pred_fallthru
      _
    // Predicated region
    $region6: #{forward.1} parent=1 // pred_check
      _
    $region7: #{forward.1} parent=1 // pred_check_branch
      %12 = sbr.rel (0) target = $region9
    $region8: #{forward.1} parent=1 // pred_region
      %14 = vsyncadd [#allocation4], 0
      %s15 = sshll.u32 %s1, 4
      %s16 = int_to_ptr.hbm [resolvable:$true] %s15
      %s17 = sshll.u32 [#allocation3], 4
      %s18 = int_to_ptr.vmem [resolvable:$true] %s17
      %23 = dma.hbm_to_vmem [thread:$0]  %s16, 1024, %s18, [#allocation4], 128, 128, 8
    $region9: #{forward.1} parent=1 // pred_fallthru
      _
    // Predicated region
    $region10: #{forward.1} parent=1 // pred_check
      _
    $region11: #{forward.1} parent=1 // pred_check_branch
      %25 = sbr.rel (0) target = $region13
    $region12: #{forward.1} parent=1 // pred_region
      _
    $region13: #{forward.1} parent=1 // pred_fallthru
      _
    // Predicated region
    $region14: #{forward.1} parent=1 // pred_check
      _
    $region15: #{forward.1} parent=1 // pred_check_branch
      %27 = sbr.rel (0) target = $region17
    $region16: #{forward.1} parent=1 // pred_region
      %29 = dma.done [#allocation4], 1024
    $region17: #{forward.1} parent=1 // pred_fallthru
      _
    %p30 = scmp.eq.s32.totalorder 0, 0
    // Predicated region
    $region18: #{forward.1} parent=1 // pred_check
      %p31 = pneg %p30
    $region19: #{forward.1} parent=1 // pred_check_branch
      %33 = sbr.rel (%p31) target = $region21
    $region20: #{forward.1} parent=1 // pred_region
      %34 = vst [vmem:[#allocation2] sm:$0xff] 0.0
    $region21: #{forward.1} parent=1 // pred_fallthru
      _
    %v35 = vld [vmem:[#allocation2] sm:$0xff]
    %v36 = vld [vmem:[%s0] sm:$0xff]
    %v37 = vld [vmem:[#allocation3] sm:$0xff]
    %v38 = vld [vmem:[#allocation3 + $0x8] sm:$0xff]
    %v39 = vld [vmem:[#allocation3 + $0x10] sm:$0xff]
    %v40 = vld [vmem:[#allocation3 + $0x18] sm:$0xff]
    %v41 = vld [vmem:[#allocation3 + $0x20] sm:$0xff]
    %v42 = vld [vmem:[#allocation3 + $0x28] sm:$0xff]
    %v43 = vld [vmem:[#allocation3 + $0x30] sm:$0xff]
    %v44 = vld [vmem:[#allocation3 + $0x38] sm:$0xff]
    %vm45 = vcmask 523264
    %v47 = vsel %vm45, %v36, 0
    %49 = vmatpush.msra.mxu0 0.0
    %50 = vmatpush.msra.mxu0 0.0
    %51 = vmatpush.msra.mxu0 0.0
    %52 = vmatpush.msra.mxu0 0.0
    %53 = vmatpush.msra.mxu0 0.0
    %54 = vmatpush.msra.mxu0 0.0
    %55 = vmatpush.msra.mxu0 0.0
    %56 = vmatpush.msra.mxu0 0.0
    %57 = vmatpush.msra.mxu0 %v44
    %58 = vmatpush.msra.mxu0 %v43
    %59 = vmatpush.msra.mxu0 %v42
    %60 = vmatpush.msra.mxu0 %v41
    %61 = vmatpush.msra.mxu0 %v40
    %62 = vmatpush.msra.mxu0 %v39
    %63 = vmatpush.msra.mxu0 %v38
    %64 = vmatpush.msra.mxu0 %v37
    %65 = vmatmul.f32.gmra.mxu0 %v47
    %v66 = vpop.f32.mrf.mxu0
    %v67 = vadd.f32 0.0, %v66
    %68 = vdwg.mxu0
    %v69 = vadd.f32 %v35, %v67
    %70 = vst [vmem:[#allocation2] sm:$0xff] %v69
    // Predicated region
    $region22: #{forward.1} parent=1 // pred_check
      %p71 = pneg %p30
    $region23: #{forward.1} parent=1 // pred_check_branch
      %73 = sbr.rel (%p71) target = $region25
    $region24: #{forward.1} parent=1 // pred_region
      %v74 = vld [vmem:[#allocation2] sm:$0xff]
      %v75 = vld [vmem:[%s2] sm:$0x1]
      %v77 = vperm.slane %v75, 0
      %v79 = vadd.f32 %v74, %v77
      %80 = vst [vmem:[%s3] sm:$0xff] %v79
    $region25: #{forward.1} parent=1 // pred_fallthru
      _
    // Predicated region
    $region26: #{forward.1} parent=1 // pred_check
      _
    $region27: #{forward.1} parent=1 // pred_check_branch
      %82 = sbr.rel (0) target = $region29
    $region28: #{forward.1} parent=1 // pred_region
      _
    $region29: #{forward.1} parent=1 // pred_fallthru
      _
    // Predicated region
    $region30: #{forward.1} parent=1 // pred_check
      _
    $region31: #{forward.1} parent=1 // pred_check_branch
      %84 = sbr.rel (0) target = $region33
    $region32: #{forward.1} parent=1 // pred_region
      _
    $region33: #{forward.1} parent=1 // pred_fallthru
      _
    %85 = vsyncpa [#allocation4], 1

</llo_original>
